<compile_context>
chip_gen: v6e
topology: v6e:2x2x1
jax: 0.10.0
libtpu: 0.0.40
codegen_flags: <defaults>
</compile_context>

<pallas_src>
import jax
import jax.numpy as jnp
from jax.experimental import pallas as pl
from jax.experimental.pallas import tpu as pltpu


def _critic_kernel(sa_ref,
                   w1_ref, b1_ref, w2_ref, b2_ref,
                   w4_ref, b4_ref, w5_ref, b5_ref,
                   w36_ref, b36_ref,
                   q_ref):
    f32 = jnp.float32
    bf16 = jnp.bfloat16
    sa = sa_ref[...]                                   # (tile_b, S+A) bf16

    # --- Q1 head: two MXU matmuls with f32 accumulation ---
    h = jnp.dot(sa, w1_ref[...], preferred_element_type=f32) + b1_ref[...]
    h = jnp.maximum(h, 0.0)
    h = jnp.dot(h.astype(bf16), w2_ref[...], preferred_element_type=f32) + b2_ref[...]
    h = jnp.maximum(h, 0.0)

    # --- Q2 head ---
    g = jnp.dot(sa, w4_ref[...], preferred_element_type=f32) + b4_ref[...]
    g = jnp.maximum(g, 0.0)
    g = jnp.dot(g.astype(bf16), w5_ref[...], preferred_element_type=f32) + b5_ref[...]
    g = jnp.maximum(g, 0.0)

    # --- final N=1 projections on VPU/XLU (avoid lane-sparse MXU matmuls),
    #     written lane-major straight into the (2, tile_b) output block ---
    q1 = jnp.sum(h * w36_ref[0:1, :], axis=-1) + b36_ref[0]   # (tile_b,)
    q2 = jnp.sum(g * w36_ref[1:2, :], axis=-1) + b36_ref[1]   # (tile_b,)
    q_ref[0, :] = q1.astype(q_ref.dtype)
    q_ref[1, :] = q2.astype(q_ref.dtype)


def _pack_params(params):
    """Pack per-layer params into the kernel layout (MXU weights in bf16)."""
    (w1, b1, w2, b2, w3, b3, w4, b4, w5, b5, w6, b6) = params
    bf16 = jnp.bfloat16
    w36 = jnp.concatenate([w3.T, w6.T], axis=0)                       # (2, H) f32
    b36 = jnp.concatenate([b3.reshape(-1), b6.reshape(-1)], axis=0)   # (2,)  f32
    return (w1.astype(bf16), b1, w2.astype(bf16), b2,
            w4.astype(bf16), b4, w5.astype(bf16), b5, w36, b36)


def _choose_tile_b(B):
    """Batch tile: >=2 grid steps for B>=256 (v7x megacore), lane-dense output
    requires tile_b % 128 == 0 whenever the grid has more than one step."""
    if B < 256:
        return B                      # single full block (full-dim block shapes)
    half = pl.cdiv(B, 2)
    tile = ((half + 127) // 128) * 128
    return min(tile, 1024)


def critic_forward(state, action, params):
    """Twin-Q forward: returns (q1, q2), each of shape (B, 1)."""
    B = state.shape[0]
    (w1, b1, w2, b2, w4, b4, w5, b5, w36, b36) = _pack_params(params)
    SA = w1.shape[0]
    H = w2.shape[0]

    # single concat in the wrapper -> one dense K = S+A matmul per head
    sa = jnp.concatenate([state, action], axis=1).astype(jnp.bfloat16)  # (B, S+A)

    tile_b = _choose_tile_b(B)
    grid = (pl.cdiv(B, tile_b),)

    const = lambda i: (0, 0)

    q = pl.pallas_call(
        _critic_kernel,
        out_shape=jax.ShapeDtypeStruct((2, B), jnp.float32),
        grid_spec=pltpu.PrefetchScalarGridSpec(
            num_scalar_prefetch=0,
            grid=grid,
            in_specs=[
                # batch-tiled fused input
                pl.BlockSpec((tile_b, SA), lambda i: (i, 0)),
                # weights/biases: full-array blocks, constant index_map -> VMEM resident
                pl.BlockSpec((SA, H), const),   # w1 (bf16)
                pl.BlockSpec((1, H), const),    # b1 (f32)
                pl.BlockSpec((H, H), const),    # w2 (bf16)
                pl.BlockSpec((1, H), const),    # b2 (f32)
                pl.BlockSpec((SA, H), const),   # w4 (bf16)
                pl.BlockSpec((1, H), const),    # b4 (f32)
                pl.BlockSpec((H, H), const),    # w5 (bf16)
                pl.BlockSpec((1, H), const),    # b5 (f32)
                pl.BlockSpec((2, H), const),    # w36 (f32, VPU path)
                # final-layer bias scalars in SMEM
                pl.BlockSpec(memory_space=pltpu.MemorySpace.SMEM),
            ],
            out_specs=pl.BlockSpec((2, tile_b), lambda i: (0, i)),
        ),
        compiler_params=pltpu.CompilerParams(
            dimension_semantics=("parallel",),
            vmem_limit_bytes=32 * 1024 * 1024,
        ),
    )(sa, w1, b1, w2, b2, w4, b4, w5, b5, w36, b36)

    return q[0:1, :].T, q[1:2, :].T


def init_critic_params(key, state_dim, action_dim, hidden_dim=256):
    """Deterministic init mimicking nn.Linear's U(-1/sqrt(fan_in), 1/sqrt(fan_in)).

    Weights stored as (in_features, out_features); biases stored as (1, out)."""
    in_dim = state_dim + action_dim
    dims = [
        (in_dim, hidden_dim),      # l1
        (hidden_dim, hidden_dim),  # l2
        (hidden_dim, 1),           # l3
        (in_dim, hidden_dim),      # l4
        (hidden_dim, hidden_dim),  # l5
        (hidden_dim, 1),           # l6
    ]
    params = []
    for (fan_in, fan_out) in dims:
        key, kw, kb = jax.random.split(key, 3)
        bound = 1.0 / jnp.sqrt(jnp.float32(fan_in))
        w = jax.random.uniform(kw, (fan_in, fan_out), jnp.float32, -bound, bound)
        b = jax.random.uniform(kb, (1, fan_out), jnp.float32, -bound, bound)
        params.extend([w, b])
    return tuple(params)


def critic_forward_ref(state, action, params):
    """Plain-JAX f32 reference for validation (mirrors the PyTorch module)."""
    sa = jnp.concatenate([state, action], axis=1)
    (w1, b1, w2, b2, w3, b3, w4, b4, w5, b5, w6, b6) = params
    h = jnp.maximum(sa @ w1 + b1, 0.0)
    h = jnp.maximum(h @ w2 + b2, 0.0)
    q1 = h @ w3 + b3
    g = jnp.maximum(sa @ w4 + b4, 0.0)
    g = jnp.maximum(g @ w5 + b5, 0.0)
    q2 = g @ w6 + b6
    return q1, q2


if __name__ == "__main__":
    key = jax.random.PRNGKey(0)

    # --- small smoke test (single block path, H not a multiple of 128) ---
    batch, state_dim, action_dim, hidden_dim = 2, 8, 4, 32
    key, ks, ka, kp = jax.random.split(key, 4)
    state = jax.random.normal(ks, (batch, state_dim), jnp.float32)
    action = jax.random.normal(ka, (batch, action_dim), jnp.float32)
    params = init_critic_params(kp, state_dim, action_dim, hidden_dim)

    q1, q2 = critic_forward(state, action, params)
    jax.block_until_ready((q1, q2))
    q1_ref, q2_ref = critic_forward_ref(state, action, params)
    assert q1.shape == (batch, 1) and q2.shape == (batch, 1)
    # bf16 MXU path -> compare against the f32 reference with a looser tolerance
    assert jnp.allclose(q1, q1_ref, atol=5e-2, rtol=5e-2)
    assert jnp.allclose(q2, q2_ref, atol=5e-2, rtol=5e-2)

    # --- larger test exercising the 2-step batch grid (v7x-style split) ---
    batch2, state_dim2, action_dim2, hidden_dim2 = 512, 24, 8, 256
    key, ks2, ka2, kp2 = jax.random.split(key, 4)
    state2 = jax.random.normal(ks2, (batch2, state_dim2), jnp.float32)
    action2 = jax.random.normal(ka2, (batch2, action_dim2), jnp.float32)
    params2 = init_critic_params(kp2, state_dim2, action_dim2, hidden_dim2)

    p1, p2 = critic_forward(state2, action2, params2)
    jax.block_until_ready((p1, p2))
    p1_ref, p2_ref = critic_forward_ref(state2, action2, params2)
    assert p1.shape == (batch2, 1) and p2.shape == (batch2, 1)
    assert jnp.allclose(p1, p1_ref, atol=5e-2, rtol=5e-2)
    assert jnp.allclose(p2, p2_ref, atol=5e-2, rtol=5e-2)

    print("KERNEL_OK")
</pallas_src>

<mosaic_0001>
module attributes {stable_mosaic.version = 11 : i64} {
  func.func @_critic_kernel(%arg0: i32, %arg1: memref<2x12xbf16, #tpu.memory_space<vmem>>, %arg2: memref<12x32xbf16, #tpu.memory_space<vmem>>, %arg3: memref<1x32xf32, #tpu.memory_space<vmem>>, %arg4: memref<32x32xbf16, #tpu.memory_space<vmem>>, %arg5: memref<1x32xf32, #tpu.memory_space<vmem>>, %arg6: memref<12x32xbf16, #tpu.memory_space<vmem>>, %arg7: memref<1x32xf32, #tpu.memory_space<vmem>>, %arg8: memref<32x32xbf16, #tpu.memory_space<vmem>>, %arg9: memref<1x32xf32, #tpu.memory_space<vmem>>, %arg10: memref<2x32xf32, #tpu.memory_space<vmem>>, %arg11: memref<2xf32, #tpu.memory_space<smem>>, %arg12: memref<2x2xf32, #tpu.memory_space<vmem>>) attributes {dimension_semantics = [#tpu.dimension_semantics<parallel>], iteration_bounds = array<i64: 1>, scalar_prefetch = 0 : i64, scratch_operands = 0 : i64, tpu.core_type = #tpu.core_type<tc>, window_params = [{transform_indices = @transform_0, window_bounds = array<i64: 2, 12>}, {pipeline_mode = #tpu.pipeline_mode<synchronous>, transform_indices = @transform_1, window_bounds = array<i64: 12, 32>}, {pipeline_mode = #tpu.pipeline_mode<synchronous>, transform_indices = @transform_2, window_bounds = array<i64: 1, 32>}, {pipeline_mode = #tpu.pipeline_mode<synchronous>, transform_indices = @transform_3, window_bounds = array<i64: 32, 32>}, {pipeline_mode = #tpu.pipeline_mode<synchronous>, transform_indices = @transform_4, window_bounds = array<i64: 1, 32>}, {pipeline_mode = #tpu.pipeline_mode<synchronous>, transform_indices = @transform_5, window_bounds = array<i64: 12, 32>}, {pipeline_mode = #tpu.pipeline_mode<synchronous>, transform_indices = @transform_6, window_bounds = array<i64: 1, 32>}, {pipeline_mode = #tpu.pipeline_mode<synchronous>, transform_indices = @transform_7, window_bounds = array<i64: 32, 32>}, {pipeline_mode = #tpu.pipeline_mode<synchronous>, transform_indices = @transform_8, window_bounds = array<i64: 1, 32>}, {pipeline_mode = #tpu.pipeline_mode<synchronous>, transform_indices = @transform_9, window_bounds = array<i64: 2, 32>}, {transform_indices = @transform_10, window_bounds = array<i64: 2>}, {transform_indices = @transform_11, window_bounds = array<i64: 2, 2>}]} {
    %c0 = arith.constant 0 : index
    %c0_0 = arith.constant 0 : index
    %0 = vector.load %arg1[%c0, %c0_0] : memref<2x12xbf16, #tpu.memory_space<vmem>>, vector<2x12xbf16>
    %c0_1 = arith.constant 0 : index
    %c0_2 = arith.constant 0 : index
    %1 = vector.load %arg2[%c0_1, %c0_2] : memref<12x32xbf16, #tpu.memory_space<vmem>>, vector<12x32xbf16>
    %cst = arith.constant dense<0.000000e+00> : vector<2x32xf32>
    %2 = tpu.matmul %0, %1, %cst {dimension_numbers = #tpu.dot_dimension_numbers<[1], [0], [0], [1], [0, 0, 1, 1], [], []>} : vector<2x12xbf16>, vector<12x32xbf16>, vector<2x32xf32> -> vector<2x32xf32>
    %c0_3 = arith.constant 0 : index
    %c0_4 = arith.constant 0 : index
    %3 = vector.load %arg3[%c0_3, %c0_4] : memref<1x32xf32, #tpu.memory_space<vmem>>, vector<1x32xf32>
    %4 = vector.broadcast %3 : vector<1x32xf32> to vector<2x32xf32>
    %5 = arith.addf %2, %4 : vector<2x32xf32>
    %cst_5 = arith.constant 0.000000e+00 : f32
    %6 = vector.broadcast %cst_5 : f32 to vector<2x32xf32>
    %7 = arith.maximumf %5, %6 : vector<2x32xf32>
    %8 = arith.truncf %7 : vector<2x32xf32> to vector<2x32xbf16>
    %c0_6 = arith.constant 0 : index
    %c0_7 = arith.constant 0 : index
    %9 = vector.load %arg4[%c0_6, %c0_7] : memref<32x32xbf16, #tpu.memory_space<vmem>>, vector<32x32xbf16>
    %cst_8 = arith.constant dense<0.000000e+00> : vector<2x32xf32>
    %10 = tpu.matmul %8, %9, %cst_8 {dimension_numbers = #tpu.dot_dimension_numbers<[1], [0], [0], [1], [0, 0, 1, 1], [], []>} : vector<2x32xbf16>, vector<32x32xbf16>, vector<2x32xf32> -> vector<2x32xf32>
    %c0_9 = arith.constant 0 : index
    %c0_10 = arith.constant 0 : index
    %11 = vector.load %arg5[%c0_9, %c0_10] : memref<1x32xf32, #tpu.memory_space<vmem>>, vector<1x32xf32>
    %12 = vector.broadcast %11 : vector<1x32xf32> to vector<2x32xf32>
    %13 = arith.addf %10, %12 : vector<2x32xf32>
    %cst_11 = arith.constant 0.000000e+00 : f32
    %14 = vector.broadcast %cst_11 : f32 to vector<2x32xf32>
    %15 = arith.maximumf %13, %14 : vector<2x32xf32>
    %c0_12 = arith.constant 0 : index
    %c0_13 = arith.constant 0 : index
    %16 = vector.load %arg6[%c0_12, %c0_13] : memref<12x32xbf16, #tpu.memory_space<vmem>>, vector<12x32xbf16>
    %cst_14 = arith.constant dense<0.000000e+00> : vector<2x32xf32>
    %17 = tpu.matmul %0, %16, %cst_14 {dimension_numbers = #tpu.dot_dimension_numbers<[1], [0], [0], [1], [0, 0, 1, 1], [], []>} : vector<2x12xbf16>, vector<12x32xbf16>, vector<2x32xf32> -> vector<2x32xf32>
    %c0_15 = arith.constant 0 : index
    %c0_16 = arith.constant 0 : index
    %18 = vector.load %arg7[%c0_15, %c0_16] : memref<1x32xf32, #tpu.memory_space<vmem>>, vector<1x32xf32>
    %19 = vector.broadcast %18 : vector<1x32xf32> to vector<2x32xf32>
    %20 = arith.addf %17, %19 : vector<2x32xf32>
    %cst_17 = arith.constant 0.000000e+00 : f32
    %21 = vector.broadcast %cst_17 : f32 to vector<2x32xf32>
    %22 = arith.maximumf %20, %21 : vector<2x32xf32>
    %23 = arith.truncf %22 : vector<2x32xf32> to vector<2x32xbf16>
    %c0_18 = arith.constant 0 : index
    %c0_19 = arith.constant 0 : index
    %24 = vector.load %arg8[%c0_18, %c0_19] : memref<32x32xbf16, #tpu.memory_space<vmem>>, vector<32x32xbf16>
    %cst_20 = arith.constant dense<0.000000e+00> : vector<2x32xf32>
    %25 = tpu.matmul %23, %24, %cst_20 {dimension_numbers = #tpu.dot_dimension_numbers<[1], [0], [0], [1], [0, 0, 1, 1], [], []>} : vector<2x32xbf16>, vector<32x32xbf16>, vector<2x32xf32> -> vector<2x32xf32>
    %c0_21 = arith.constant 0 : index
    %c0_22 = arith.constant 0 : index
    %26 = vector.load %arg9[%c0_21, %c0_22] : memref<1x32xf32, #tpu.memory_space<vmem>>, vector<1x32xf32>
    %27 = vector.broadcast %26 : vector<1x32xf32> to vector<2x32xf32>
    %28 = arith.addf %25, %27 : vector<2x32xf32>
    %cst_23 = arith.constant 0.000000e+00 : f32
    %29 = vector.broadcast %cst_23 : f32 to vector<2x32xf32>
    %30 = arith.maximumf %28, %29 : vector<2x32xf32>
    %c0_24 = arith.constant 0 : index
    %c0_25 = arith.constant 0 : index
    %31 = vector.load %arg10[%c0_24, %c0_25] : memref<2x32xf32, #tpu.memory_space<vmem>>, vector<1x32xf32>
    %32 = vector.broadcast %31 : vector<1x32xf32> to vector<2x32xf32>
    %33 = arith.mulf %15, %32 : vector<2x32xf32>
    %cst_26 = arith.constant dense<0.000000e+00> : vector<2xf32>
    %34 = vector.multi_reduction <add>, %33, %cst_26 [1] : vector<2x32xf32> to vector<2xf32>
    %c0_27 = arith.constant 0 : index
    %35 = memref.load %arg11[%c0_27] : memref<2xf32, #tpu.memory_space<smem>>
    %36 = vector.broadcast %35 : f32 to vector<2xf32>
    %37 = arith.addf %34, %36 : vector<2xf32>
    %c1 = arith.constant 1 : index
    %c0_28 = arith.constant 0 : index
    %38 = vector.load %arg10[%c1, %c0_28] : memref<2x32xf32, #tpu.memory_space<vmem>>, vector<1x32xf32>
    %39 = vector.broadcast %38 : vector<1x32xf32> to vector<2x32xf32>
    %40 = arith.mulf %30, %39 : vector<2x32xf32>
    %cst_29 = arith.constant dense<0.000000e+00> : vector<2xf32>
    %41 = vector.multi_reduction <add>, %40, %cst_29 [1] : vector<2x32xf32> to vector<2xf32>
    %c1_30 = arith.constant 1 : index
    %42 = memref.load %arg11[%c1_30] : memref<2xf32, #tpu.memory_space<smem>>
    %43 = vector.broadcast %42 : f32 to vector<2xf32>
    %44 = arith.addf %41, %43 : vector<2xf32>
    %c0_31 = arith.constant 0 : index
    %c0_32 = arith.constant 0 : index
    %45 = vector.load %arg12[%c0_31, %c0_32] : memref<2x2xf32, #tpu.memory_space<vmem>>, vector<1x2xf32>
    %46 = vector.shape_cast %45 : vector<1x2xf32> to vector<2xf32>
    %47 = vector.shape_cast %37 : vector<2xf32> to vector<1x2xf32>
    tpu.vector_store %arg12[%c0_31, %c0_32], %47 {strides = array<i32>} : memref<2x2xf32, #tpu.memory_space<vmem>>, vector<1x2xf32>,
    %c1_33 = arith.constant 1 : index
    %c0_34 = arith.constant 0 : index
    %48 = vector.load %arg12[%c1_33, %c0_34] : memref<2x2xf32, #tpu.memory_space<vmem>>, vector<1x2xf32>
    %49 = vector.shape_cast %48 : vector<1x2xf32> to vector<2xf32>
    %50 = vector.shape_cast %44 : vector<2xf32> to vector<1x2xf32>
    tpu.vector_store %arg12[%c1_33, %c0_34], %50 {strides = array<i32>} : memref<2x2xf32, #tpu.memory_space<vmem>>, vector<1x2xf32>,
    return
  }
  func.func @transform_0(%arg0: i32) -> (i32, i32) {
    %c0_i32 = arith.constant 0 : i32
    %c0_i32_0 = arith.constant 0 : i32
    return %arg0, %c0_i32 : i32, i32
  }
  func.func @transform_1(%arg0: i32) -> (i32, i32) {
    %c0_i32 = arith.constant 0 : i32
    %c0_i32_0 = arith.constant 0 : i32
    %c0_i32_1 = arith.constant 0 : i32
    return %c0_i32, %c0_i32_0 : i32, i32
  }
  func.func @transform_2(%arg0: i32) -> (i32, i32) {
    %c0_i32 = arith.constant 0 : i32
    %c0_i32_0 = arith.constant 0 : i32
    %c0_i32_1 = arith.constant 0 : i32
    return %c0_i32, %c0_i32_0 : i32, i32
  }
  func.func @transform_3(%arg0: i32) -> (i32, i32) {
    %c0_i32 = arith.constant 0 : i32
    %c0_i32_0 = arith.constant 0 : i32
    %c0_i32_1 = arith.constant 0 : i32
    return %c0_i32, %c0_i32_0 : i32, i32
  }
  func.func @transform_4(%arg0: i32) -> (i32, i32) {
    %c0_i32 = arith.constant 0 : i32
    %c0_i32_0 = arith.constant 0 : i32
    %c0_i32_1 = arith.constant 0 : i32
    return %c0_i32, %c0_i32_0 : i32, i32
  }
  func.func @transform_5(%arg0: i32) -> (i32, i32) {
    %c0_i32 = arith.constant 0 : i32
    %c0_i32_0 = arith.constant 0 : i32
    %c0_i32_1 = arith.constant 0 : i32
    return %c0_i32, %c0_i32_0 : i32, i32
  }
  func.func @transform_6(%arg0: i32) -> (i32, i32) {
    %c0_i32 = arith.constant 0 : i32
    %c0_i32_0 = arith.constant 0 : i32
    %c0_i32_1 = arith.constant 0 : i32
    return %c0_i32, %c0_i32_0 : i32, i32
  }
  func.func @transform_7(%arg0: i32) -> (i32, i32) {
    %c0_i32 = arith.constant 0 : i32
    %c0_i32_0 = arith.constant 0 : i32
    %c0_i32_1 = arith.constant 0 : i32
    return %c0_i32, %c0_i32_0 : i32, i32
  }
  func.func @transform_8(%arg0: i32) -> (i32, i32) {
    %c0_i32 = arith.constant 0 : i32
    %c0_i32_0 = arith.constant 0 : i32
    %c0_i32_1 = arith.constant 0 : i32
    return %c0_i32, %c0_i32_0 : i32, i32
  }
  func.func @transform_9(%arg0: i32) -> (i32, i32) {
    %c0_i32 = arith.constant 0 : i32
    %c0_i32_0 = arith.constant 0 : i32
    %c0_i32_1 = arith.constant 0 : i32
    return %c0_i32, %c0_i32_0 : i32, i32
  }
  func.func @transform_10(%arg0: i32) -> i32 {
    %c0_i32 = arith.constant 0 : i32
    %c0_i32_0 = arith.constant 0 : i32
    return %c0_i32 : i32
  }
  func.func @transform_11(%arg0: i32) -> (i32, i32) {
    %c0_i32 = arith.constant 0 : i32
    %c0_i32_0 = arith.constant 0 : i32
    return %c0_i32, %arg0 : i32, i32
  }
}

</mosaic_0001>

<llo_original>
// kernel: tpu_custom_call.1
$region0: #{tpu_custom_call.1}
  #allocation0 [shape = 'u32[]', space=smem, size = 0x4, offset = 0x4, fixed_abs, tag = 'smem constant byte address 0x4 - core index']
  #allocation1 [shape = 'u32[144,128]{1,0:T(1,128)}', space=vmem, size = 0x12000, scoped, tag = 'internal scratch']
  %s0 = inlined_call_operand.hbm [shape: bf16[2,12], index: 0, kind: input, shape index: {}]
  %s1 = inlined_call_operand.hbm [shape: bf16[12,32], index: 1, kind: input, shape index: {}]
  %s2 = inlined_call_operand.hbm [shape: f32[1,32], index: 2, kind: input, shape index: {}]
  %s3 = inlined_call_operand.hbm [shape: bf16[32,32], index: 3, kind: input, shape index: {}]
  %s4 = inlined_call_operand.hbm [shape: f32[1,32], index: 4, kind: input, shape index: {}]
  %s5 = inlined_call_operand.vmem [shape: bf16[12,32], index: 5, kind: input, shape index: {}]
  %s6 = inlined_call_operand.hbm [shape: f32[1,32], index: 6, kind: input, shape index: {}]
  %s7 = inlined_call_operand.hbm [shape: bf16[32,32], index: 7, kind: input, shape index: {}]
  %s8 = inlined_call_operand.vmem [shape: f32[1,32], index: 8, kind: input, shape index: {}]
  %s9 = inlined_call_operand.vmem [shape: f32[2,32], index: 9, kind: input, shape index: {}]
  %s10 = inlined_call_operand.vmem [shape: f32[2], index: 10, kind: input, shape index: {}]
  %s11 = inlined_call_operand.hbm [shape: f32[2,2], index: 11, kind: output, shape index: {}]
  %s12 = sld [smem:[#allocation0]]
  $region86: #{tpu_custom_call.1} parent=0
    _
  %s14 = ssub.s32 1, %s12
  %s15 = scalar_select 0, %s14, %s12
  $region1: #{tpu_custom_call.1} parent=0
    #allocation2 [shape = 'u8[512]{0}', space=vmem, size = 0x400, scoped, tag = 'input window, operand 0, single buffered']
    #allocation3 [shape = 's32[1]{0}', space=sflag, size = 0x4, scoped, tag = 'scoped memory for tpu_custom_call.1']
    #allocation4 [shape = 's32[1]{0}', space=sflag, size = 0x4, scoped, tag = 'scoped memory for tpu_custom_call.1']
    #allocation5 [shape = 's32[1]{0}', space=sflag, size = 0x4, scoped, tag = 'scoped memory for tpu_custom_call.1']
    #allocation6 [shape = 'u8[4096]{0}', space=vmem, size = 0x1000, scoped, tag = 'input window, operand 1, single buffered']
    #allocation7 [shape = 's32[1]{0}', space=sflag, size = 0x4, scoped, tag = 'scoped memory for tpu_custom_call.1']
    #allocation8 [shape = 'u8[512]{0}', space=vmem, size = 0x400, scoped, tag = 'input window, operand 2, single buffered']
    #allocation9 [shape = 'u8[8192]{0}', space=vmem, size = 0x2000, scoped, tag = 'input window, operand 3, single buffered']
    #allocation10 [shape = 's32[1]{0}', space=sflag, size = 0x4, scoped, tag = 'scoped memory for tpu_custom_call.1']
    #allocation11 [shape = 'u8[512]{0}', space=vmem, size = 0x400, scoped, tag = 'input window, operand 4, single buffered']
    #allocation12 [shape = 'u8[512]{0}', space=vmem, size = 0x400, scoped, tag = 'input window, operand 6, single buffered']
    #allocation13 [shape = 's32[1]{0}', space=sflag, size = 0x4, scoped, tag = 'scoped memory for tpu_custom_call.1']
    #allocation14 [shape = 'u8[8192]{0}', space=vmem, size = 0x2000, scoped, tag = 'input window, operand 7, single buffered']
    #allocation15 [shape = 'u8[512]{0}', space=smem, size = 0x200, scoped, tag = 'input window, operand 10, single buffered']
    #allocation16 [shape = 'u8[1024]{0}', space=vmem, size = 0x400, scoped, tag = 'output window, operand 0, single buffered']
    %16 = vsyncpa [#allocation3], 0
    %17 = vsyncpa [#allocation7], 0
    %18 = vsyncpa [#allocation10], 0
    %19 = vsyncpa [#allocation13], 0
    %20 = vsyncpa [#allocation5], 0
    %21 = vsyncpa [#allocation4], 0
    // Predicated region
    $region2: #{tpu_custom_call.1} parent=1 // pred_check
      _
    $region3: #{tpu_custom_call.1} parent=1 // pred_check_branch
      %23 = sbr.rel (0) target = $region5
    $region4: #{tpu_custom_call.1} parent=1 // pred_region
      %s25 = ssub.s32 16, 16
      %26 = vsyncadd [#allocation3], %s25
      %s28 = sshll.u32 [#allocation2], 4
      %s29 = int_to_ptr.vmem [resolvable:$true] %s28
      %31 = dma.hbm_to_vmem [thread:$0]  %s0, 16, %s29, [#allocation3]
    $region5: #{tpu_custom_call.1} parent=1 // pred_fallthru
      _
    // Predicated region
    $region6: #{tpu_custom_call.1} parent=1 // pred_check
      _
    $region7: #{tpu_custom_call.1} parent=1 // pred_check_branch
      %33 = sbr.rel (0) target = $region9
    $region8: #{tpu_custom_call.1} parent=1 // pred_region
      %s35 = ssub.s32 128, 128
      %36 = vsyncadd [#allocation7], %s35
      %s37 = sshll.u32 [#allocation6], 4
      %s38 = int_to_ptr.vmem [resolvable:$true] %s37
      %43 = dma.hbm_to_vmem [thread:$0]  %s1, 128, %s38, [#allocation7], 64, 64, 4
    $region9: #{tpu_custom_call.1} parent=1 // pred_fallthru
      _
    // Predicated region
    $region10: #{tpu_custom_call.1} parent=1 // pred_check
      _
    $region11: #{tpu_custom_call.1} parent=1 // pred_check_branch
      %45 = sbr.rel (0) target = $region13
    $region12: #{tpu_custom_call.1} parent=1 // pred_region
      %s47 = ssub.s32 16, 16
      %48 = vsyncadd [#allocation7], %s47
      %s50 = sshll.u32 [#allocation8], 4
      %s51 = int_to_ptr.vmem [resolvable:$true] %s50
      %53 = dma.hbm_to_vmem [thread:$0]  %s2, 16, %s51, [#allocation7]
    $region13: #{tpu_custom_call.1} parent=1 // pred_fallthru
      _
    // Predicated region
    $region14: #{tpu_custom_call.1} parent=1 // pred_check
      _
    $region15: #{tpu_custom_call.1} parent=1 // pred_check_branch
      %55 = sbr.rel (0) target = $region17
    $region16: #{tpu_custom_call.1} parent=1 // pred_region
      %s57 = ssub.s32 256, 256
      %58 = vsyncadd [#allocation10], %s57
      %s59 = sshll.u32 [#allocation9], 4
      %s60 = int_to_ptr.vmem [resolvable:$true] %s59
      %65 = dma.hbm_to_vmem [thread:$0]  %s3, 256, %s60, [#allocation10], 64, 64, 4
    $region17: #{tpu_custom_call.1} parent=1 // pred_fallthru
      _
    // Predicated region
    $region18: #{tpu_custom_call.1} parent=1 // pred_check
      _
    $region19: #{tpu_custom_call.1} parent=1 // pred_check_branch
      %67 = sbr.rel (0) target = $region21
    $region20: #{tpu_custom_call.1} parent=1 // pred_region
      %s69 = ssub.s32 16, 16
      %70 = vsyncadd [#allocation10], %s69
      %s72 = sshll.u32 [#allocation11], 4
      %s73 = int_to_ptr.vmem [resolvable:$true] %s72
      %75 = dma.hbm_to_vmem [thread:$0]  %s4, 16, %s73, [#allocation10]
    $region21: #{tpu_custom_call.1} parent=1 // pred_fallthru
      _
    // Predicated region
    $region22: #{tpu_custom_call.1} parent=1 // pred_check
      _
    $region23: #{tpu_custom_call.1} parent=1 // pred_check_branch
      %77 = sbr.rel (0) target = $region25
    $region24: #{tpu_custom_call.1} parent=1 // pred_region
      _
    $region25: #{tpu_custom_call.1} parent=1 // pred_fallthru
      _
    // Predicated region
    $region26: #{tpu_custom_call.1} parent=1 // pred_check
      _
    $region27: #{tpu_custom_call.1} parent=1 // pred_check_branch
      %79 = sbr.rel (0) target = $region29
    $region28: #{tpu_custom_call.1} parent=1 // pred_region
      %s81 = ssub.s32 16, 16
      %82 = vsyncadd [#allocation13], %s81
      %s84 = sshll.u32 [#allocation12], 4
      %s85 = int_to_ptr.vmem [resolvable:$true] %s84
      %87 = dma.hbm_to_vmem [thread:$0]  %s6, 16, %s85, [#allocation13]
    $region29: #{tpu_custom_call.1} parent=1 // pred_fallthru
      _
    // Predicated region
    $region30: #{tpu_custom_call.1} parent=1 // pred_check
      _
    $region31: #{tpu_custom_call.1} parent=1 // pred_check_branch
      %89 = sbr.rel (0) target = $region33
    $region32: #{tpu_custom_call.1} parent=1 // pred_region
      %s91 = ssub.s32 256, 256
      %92 = vsyncadd [#allocation13], %s91
      %s93 = sshll.u32 [#allocation14], 4
      %s94 = int_to_ptr.vmem [resolvable:$true] %s93
      %99 = dma.hbm_to_vmem [thread:$0]  %s7, 256, %s94, [#allocation13], 64, 64, 4
    $region33: #{tpu_custom_call.1} parent=1 // pred_fallthru
      _
    // Predicated region
    $region34: #{tpu_custom_call.1} parent=1 // pred_check
      _
    $region35: #{tpu_custom_call.1} parent=1 // pred_check_branch
      %101 = sbr.rel (0) target = $region37
    $region36: #{tpu_custom_call.1} parent=1 // pred_region
      _
    $region37: #{tpu_custom_call.1} parent=1 // pred_fallthru
      _
    // Predicated region
    $region38: #{tpu_custom_call.1} parent=1 // pred_check
      _
    $region39: #{tpu_custom_call.1} parent=1 // pred_check_branch
      %103 = sbr.rel (0) target = $region41
    $region40: #{tpu_custom_call.1} parent=1 // pred_region
      _
    $region41: #{tpu_custom_call.1} parent=1 // pred_fallthru
      _
    // Predicated region
    $region42: #{tpu_custom_call.1} parent=1 // pred_check
      _
    $region43: #{tpu_custom_call.1} parent=1 // pred_check_branch
      %105 = sbr.rel (0) target = $region45
    $region44: #{tpu_custom_call.1} parent=1 // pred_region
      %s107 = ssub.s32 16, 16
      %108 = vsyncadd [#allocation5], %s107
      %s110 = sshll.u32 %s10, 4
      %s111 = int_to_ptr.vmem [resolvable:$true] %s110
      %113 = dma.vmem_to_smem %s111, 16, [#allocation15], [#allocation5]
    $region45: #{tpu_custom_call.1} parent=1 // pred_fallthru
      _
    // Predicated region
    $region46: #{tpu_custom_call.1} parent=1 // pred_check
      _
    $region47: #{tpu_custom_call.1} parent=1 // pred_check_branch
      %115 = sbr.rel (0) target = $region49
    $region48: #{tpu_custom_call.1} parent=1 // pred_region
      %116 = dma.done [#allocation3], 16
    $region49: #{tpu_custom_call.1} parent=1 // pred_fallthru
      _
    // Predicated region
    $region50: #{tpu_custom_call.1} parent=1 // pred_check
      _
    $region51: #{tpu_custom_call.1} parent=1 // pred_check_branch
      %118 = sbr.rel (0) target = $region53
    $region52: #{tpu_custom_call.1} parent=1 // pred_region
      %119 = dma.done [#allocation7], 128
    $region53: #{tpu_custom_call.1} parent=1 // pred_fallthru
      _
    // Predicated region
    $region54: #{tpu_custom_call.1} parent=1 // pred_check
      _
    $region55: #{tpu_custom_call.1} parent=1 // pred_check_branch
      %121 = sbr.rel (0) target = $region57
    $region56: #{tpu_custom_call.1} parent=1 // pred_region
      %122 = dma.done [#allocation7], 16
    $region57: #{tpu_custom_call.1} parent=1 // pred_fallthru
      _
    // Predicated region
    $region58: #{tpu_custom_call.1} parent=1 // pred_check
      _
    $region59: #{tpu_custom_call.1} parent=1 // pred_check_branch
      %124 = sbr.rel (0) target = $region61
    $region60: #{tpu_custom_call.1} parent=1 // pred_region
      %125 = dma.done [#allocation10], 256
    $region61: #{tpu_custom_call.1} parent=1 // pred_fallthru
      _
    // Predicated region
    $region62: #{tpu_custom_call.1} parent=1 // pred_check
      _
    $region63: #{tpu_custom_call.1} parent=1 // pred_check_branch
      %127 = sbr.rel (0) target = $region65
    $region64: #{tpu_custom_call.1} parent=1 // pred_region
      %128 = dma.done [#allocation10], 16
    $region65: #{tpu_custom_call.1} parent=1 // pred_fallthru
      _
    // Predicated region
    $region66: #{tpu_custom_call.1} parent=1 // pred_check
      _
    $region67: #{tpu_custom_call.1} parent=1 // pred_check_branch
      %130 = sbr.rel (0) target = $region69
    $region68: #{tpu_custom_call.1} parent=1 // pred_region
      %131 = dma.done [#allocation13], 16
    $region69: #{tpu_custom_call.1} parent=1 // pred_fallthru
      _
    // Predicated region
    $region70: #{tpu_custom_call.1} parent=1 // pred_check
      _
    $region71: #{tpu_custom_call.1} parent=1 // pred_check_branch
      %133 = sbr.rel (0) target = $region73
    $region72: #{tpu_custom_call.1} parent=1 // pred_region
      %134 = dma.done [#allocation13], 256
    $region73: #{tpu_custom_call.1} parent=1 // pred_fallthru
      _
    // Predicated region
    $region74: #{tpu_custom_call.1} parent=1 // pred_check
      _
    $region75: #{tpu_custom_call.1} parent=1 // pred_check_branch
      %136 = sbr.rel (0) target = $region77
    $region76: #{tpu_custom_call.1} parent=1 // pred_region
      %137 = dma.done [#allocation5], 16
    $region77: #{tpu_custom_call.1} parent=1 // pred_fallthru
      _
    %138 = sfence
    %v140 = vld [vmem:[#allocation2] sm:$0x1]
    %v141 = vld [vmem:[#allocation6] sm:$0xf]
    %v142 = vld [vmem:[#allocation6 + $0x4] sm:$0x3]
    %v143 = vld [vmem:[#allocation8] sm:$0x1]
    %v145 = vlaneseq
    %v146 = vshrl.u32 %v145, 7
    %v147 = vsub.s32 0, %v146
    %v148 = vrot.slane %v143, %v147
    %v152 = vunpack.c.l.b16 %v141
    %v153 = vunpack.c.l.b16 %v142
    %v154 = vpack.c.b16 %v153, %v152
    %vm155 = vcmask 97280
    %v157 = vsel %vm155, %v140, 0
    %vm159 = vcmask 1045504
    %v161 = vsel %vm159, %v154, 0
    %163 = vmatprep.subr.bf16.mxu0 0
    %164 = vmatpush1.bf16.msra.mxu0 0
    %165 = vmatprep.subr.bf16.mxu0 0
    %166 = vmatpush1.bf16.msra.mxu0 0
    %167 = vmatprep.subr.bf16.mxu0 0
    %168 = vmatpush1.bf16.msra.mxu0 0
    %169 = vmatprep.subr.bf16.mxu0 0
    %170 = vmatpush1.bf16.msra.mxu0 0
    %171 = vmatprep.subr.bf16.mxu0 0
    %172 = vmatpush1.bf16.msra.mxu0 0
    %173 = vmatprep.subr.bf16.mxu0 0
    %174 = vmatpush1.bf16.msra.mxu0 0
    %175 = vmatprep.subr.bf16.mxu0 0
    %176 = vmatpush1.bf16.msra.mxu0 0
    %177 = vmatprep.subr.bf16.mxu0 0
    %178 = vmatpush1.bf16.msra.mxu0 %v161
    %179 = vmatprep.subr.bf16.mxu0 0
    %180 = vmatpush2.bf16.msra.mxu0 0
    %181 = vmatprep.subr.bf16.mxu0 0
    %182 = vmatpush2.bf16.msra.mxu0 0
    %183 = vmatprep.subr.bf16.mxu0 0
    %184 = vmatpush2.bf16.msra.mxu0 0
    %185 = vmatprep.subr.bf16.mxu0 0
    %186 = vmatpush2.bf16.msra.mxu0 0
    %187 = vmatprep.subr.bf16.mxu0 0
    %188 = vmatpush2.bf16.msra.mxu0 0
    %189 = vmatprep.subr.bf16.mxu0 0
    %190 = vmatpush2.bf16.msra.mxu0 0
    %191 = vmatprep.subr.bf16.mxu0 0
    %192 = vmatpush2.bf16.msra.mxu0 0
    %193 = vmatprep.subr.bf16.mxu0 0
    %194 = vmatpush2.bf16.msra.mxu0 0
    %195 = vmatprep.mubr.bf16.mxu0 0
    %196 = vmatmul.mubr.bf16.gmra.mxu0 %v157
    %v197 = vpop.f32.mrf.mxu0
    %v198 = vadd.f32 %v148, %v197
    %v199 = vpop.f32.mrf.mxu0
    %v200 = vpop.f32.mrf.mxu0
    %v201 = vpop.f32.mrf.mxu0
    %202 = vdwg.mxu0
    %v203 = vmax.f32 %v198, 0.0
    %v204 = vpack.c.bf16 %v203, %v203
    %v205 = vld [vmem:[#allocation9] sm:$0xf]
    %v206 = vld [vmem:[#allocation9 + $0x4] sm:$0xf]
    %v207 = vld [vmem:[#allocation9 + $0x8] sm:$0xf]
    %v208 = vld [vmem:[#allocation9 + $0xc] sm:$0xf]
    %v209 = vld [vmem:[#allocation11] sm:$0x1]
    %v211 = vlaneseq
    %v212 = vshrl.u32 %v211, 7
    %v213 = vsub.s32 0, %v212
    %v214 = vrot.slane %v209, %v213
    %v220 = vunpack.c.l.b16 %v205
    %v221 = vunpack.c.l.b16 %v206
    %v222 = vunpack.c.l.b16 %v207
    %v223 = vunpack.c.l.b16 %v208
    %v224 = vpack.c.b16 %v221, %v220
    %v225 = vpack.c.b16 %v223, %v222
    %vm228 = vcmask 261120
    %v230 = vsel %vm228, %v204, 0
    %232 = vmatprep.subr.bf16.mxu0 0
    %233 = vmatpush1.bf16.msra.mxu0 0
    %234 = vmatprep.subr.bf16.mxu0 0
    %235 = vmatpush1.bf16.msra.mxu0 0
    %236 = vmatprep.subr.bf16.mxu0 0
    %237 = vmatpush1.bf16.msra.mxu0 0
    %238 = vmatprep.subr.bf16.mxu0 0
    %239 = vmatpush1.bf16.msra.mxu0 0
    %240 = vmatprep.subr.bf16.mxu0 0
    %241 = vmatpush1.bf16.msra.mxu0 0
    %242 = vmatprep.subr.bf16.mxu0 0
    %243 = vmatpush1.bf16.msra.mxu0 0
    %244 = vmatprep.subr.bf16.mxu0 0
    %245 = vmatpush1.bf16.msra.mxu0 %v225
    %246 = vmatprep.subr.bf16.mxu0 0
    %247 = vmatpush1.bf16.msra.mxu0 %v224
    %248 = vmatprep.subr.bf16.mxu0 0
    %249 = vmatpush2.bf16.msra.mxu0 0
    %250 = vmatprep.subr.bf16.mxu0 0
    %251 = vmatpush2.bf16.msra.mxu0 0
    %252 = vmatprep.subr.bf16.mxu0 0
    %253 = vmatpush2.bf16.msra.mxu0 0
    %254 = vmatprep.subr.bf16.mxu0 0
    %255 = vmatpush2.bf16.msra.mxu0 0
    %256 = vmatprep.subr.bf16.mxu0 0
    %257 = vmatpush2.bf16.msra.mxu0 0
    %258 = vmatprep.subr.bf16.mxu0 0
    %259 = vmatpush2.bf16.msra.mxu0 0
    %260 = vmatprep.subr.bf16.mxu0 0
    %261 = vmatpush2.bf16.msra.mxu0 0
    %262 = vmatprep.subr.bf16.mxu0 0
    %263 = vmatpush2.bf16.msra.mxu0 0
    %264 = vmatprep.mubr.bf16.mxu0 0
    %265 = vmatmul.mubr.bf16.gmra.mxu0 %v230
    %v266 = vpop.f32.mrf.mxu0
    %v267 = vadd.f32 %v214, %v266
    %v268 = vpop.f32.mrf.mxu0
    %v269 = vpop.f32.mrf.mxu0
    %v270 = vpop.f32.mrf.mxu0
    %271 = vdwg.mxu0
    %v272 = vmax.f32 %v267, 0.0
    %v273 = vld [vmem:[%s5] sm:$0xf]
    %v274 = vld [vmem:[%s5 + $0x4] sm:$0x3]
    %v275 = vld [vmem:[#allocation12] sm:$0x1]
    %v277 = vlaneseq
    %v278 = vshrl.u32 %v277, 7
    %v279 = vsub.s32 0, %v278
    %v280 = vrot.slane %v275, %v279
    %v284 = vunpack.c.l.b16 %v273
    %v285 = vunpack.c.l.b16 %v274
    %v286 = vpack.c.b16 %v285, %v284
    %v288 = vsel %vm159, %v286, 0
    %290 = vmatprep.subr.bf16.mxu0 0
    %291 = vmatpush1.bf16.msra.mxu0 0
    %292 = vmatprep.subr.bf16.mxu0 0
    %293 = vmatpush1.bf16.msra.mxu0 0
    %294 = vmatprep.subr.bf16.mxu0 0
    %295 = vmatpush1.bf16.msra.mxu0 0
    %296 = vmatprep.subr.bf16.mxu0 0
    %297 = vmatpush1.bf16.msra.mxu0 0
    %298 = vmatprep.subr.bf16.mxu0 0
    %299 = vmatpush1.bf16.msra.mxu0 0
    %300 = vmatprep.subr.bf16.mxu0 0
    %301 = vmatpush1.bf16.msra.mxu0 0
    %302 = vmatprep.subr.bf16.mxu0 0
    %303 = vmatpush1.bf16.msra.mxu0 0
    %304 = vmatprep.subr.bf16.mxu0 0
    %305 = vmatpush1.bf16.msra.mxu0 %v288
    %306 = vmatprep.subr.bf16.mxu0 0
    %307 = vmatpush2.bf16.msra.mxu0 0
    %308 = vmatprep.subr.bf16.mxu0 0
    %309 = vmatpush2.bf16.msra.mxu0 0
    %310 = vmatprep.subr.bf16.mxu0 0
    %311 = vmatpush2.bf16.msra.mxu0 0
    %312 = vmatprep.subr.bf16.mxu0 0
    %313 = vmatpush2.bf16.msra.mxu0 0
    %314 = vmatprep.subr.bf16.mxu0 0
    %315 = vmatpush2.bf16.msra.mxu0 0
    %316 = vmatprep.subr.bf16.mxu0 0
    %317 = vmatpush2.bf16.msra.mxu0 0
    %318 = vmatprep.subr.bf16.mxu0 0
    %319 = vmatpush2.bf16.msra.mxu0 0
    %320 = vmatprep.subr.bf16.mxu0 0
    %321 = vmatpush2.bf16.msra.mxu0 0
    %322 = vmatprep.mubr.bf16.mxu0 0
    %323 = vmatmul.mubr.bf16.gmra.mxu0 %v157
    %v324 = vpop.f32.mrf.mxu0
    %v325 = vadd.f32 %v280, %v324
    %v326 = vpop.f32.mrf.mxu0
    %v327 = vpop.f32.mrf.mxu0
    %v328 = vpop.f32.mrf.mxu0
    %329 = vdwg.mxu0
    %v330 = vmax.f32 %v325, 0.0
    %v331 = vpack.c.bf16 %v330, %v330
    %v332 = vld [vmem:[#allocation14] sm:$0xf]
    %v333 = vld [vmem:[#allocation14 + $0x4] sm:$0xf]
    %v334 = vld [vmem:[#allocation14 + $0x8] sm:$0xf]
    %v335 = vld [vmem:[#allocation14 + $0xc] sm:$0xf]
    %v336 = vld [vmem:[%s8] sm:$0x1]
    %v338 = vlaneseq
    %v339 = vshrl.u32 %v338, 7
    %v340 = vsub.s32 0, %v339
    %v341 = vrot.slane %v336, %v340
    %v347 = vunpack.c.l.b16 %v332
    %v348 = vunpack.c.l.b16 %v333
    %v349 = vunpack.c.l.b16 %v334
    %v350 = vunpack.c.l.b16 %v335
    %v351 = vpack.c.b16 %v348, %v347
    %v352 = vpack.c.b16 %v350, %v349
    %v356 = vsel %vm228, %v331, 0
    %358 = vmatprep.subr.bf16.mxu0 0
    %359 = vmatpush1.bf16.msra.mxu0 0
    %360 = vmatprep.subr.bf16.mxu0 0
    %361 = vmatpush1.bf16.msra.mxu0 0
    %362 = vmatprep.subr.bf16.mxu0 0
    %363 = vmatpush1.bf16.msra.mxu0 0
    %364 = vmatprep.subr.bf16.mxu0 0
    %365 = vmatpush1.bf16.msra.mxu0 0
    %366 = vmatprep.subr.bf16.mxu0 0
    %367 = vmatpush1.bf16.msra.mxu0 0
    %368 = vmatprep.subr.bf16.mxu0 0
    %369 = vmatpush1.bf16.msra.mxu0 0
    %370 = vmatprep.subr.bf16.mxu0 0
    %371 = vmatpush1.bf16.msra.mxu0 %v352
    %372 = vmatprep.subr.bf16.mxu0 0
    %373 = vmatpush1.bf16.msra.mxu0 %v351
    %374 = vmatprep.subr.bf16.mxu0 0
    %375 = vmatpush2.bf16.msra.mxu0 0
    %376 = vmatprep.subr.bf16.mxu0 0
    %377 = vmatpush2.bf16.msra.mxu0 0
    %378 = vmatprep.subr.bf16.mxu0 0
    %379 = vmatpush2.bf16.msra.mxu0 0
    %380 = vmatprep.subr.bf16.mxu0 0
    %381 = vmatpush2.bf16.msra.mxu0 0
    %382 = vmatprep.subr.bf16.mxu0 0
    %383 = vmatpush2.bf16.msra.mxu0 0
    %384 = vmatprep.subr.bf16.mxu0 0
    %385 = vmatpush2.bf16.msra.mxu0 0
    %386 = vmatprep.subr.bf16.mxu0 0
    %387 = vmatpush2.bf16.msra.mxu0 0
    %388 = vmatprep.subr.bf16.mxu0 0
    %389 = vmatpush2.bf16.msra.mxu0 0
    %390 = vmatprep.mubr.bf16.mxu0 0
    %391 = vmatmul.mubr.bf16.gmra.mxu0 %v356
    %v392 = vpop.f32.mrf.mxu0
    %v393 = vadd.f32 %v341, %v392
    %v394 = vpop.f32.mrf.mxu0
    %v395 = vpop.f32.mrf.mxu0
    %v396 = vpop.f32.mrf.mxu0
    %397 = vdwg.mxu0
    %v398 = vmax.f32 %v393, 0.0
    %v399 = vld [vmem:[%s9] sm:$0x1]
    %v400 = vlaneseq
    %v401 = vshrl.u32 %v400, 7
    %v402 = vsub.s32 0, %v401
    %v403 = vrot.slane %v399, %v402
    %v404 = vmul.f32 %v272, %v403
    %vm405 = vcmask 254976
    %v406 = vsel %vm405, %v404, 0.0
    %407 = vadd.xlane.f32.xlu0 %v406
    %v408 = vpop.xlane.xlu0 %407
    %s409 = sld [smem:[#allocation15]]
    %v410 = vstv %s409
    %v411 = vadd.f32 %v408, %v410
    %v412 = vld [vmem:[%s9 + $0x1] sm:$0x1]
    %v413 = vlaneseq
    %v414 = vshrl.u32 %v413, 7
    %v415 = vsub.s32 0, %v414
    %v416 = vrot.slane %v412, %v415
    %v417 = vmul.f32 %v398, %v416
    %v418 = vsel %vm405, %v417, 0.0
    %419 = vadd.xlane.f32.xlu0 %v418
    %v420 = vpop.xlane.xlu0 %419
    %s421 = sld [smem:[#allocation15 + $0x1]]
    %v422 = vstv %s421
    %v423 = vadd.f32 %v420, %v422
    %v425 = vlaneseq
    %v426 = vand.u32 %v425, 127
    %v427 = vlaneseq
    %v428 = vshrl.u32 %v427, 7
    %v429 = vsub.s32 %v426, %v428
    %v430 = vrot.slane %v411, %v429
    %vm432 = vcmask 8192
    %433 = vst.msk [vmem:[#allocation16] sm:$0x1] %vm432, %v430
    %v435 = vlaneseq
    %v436 = vshrl.u32 %v435, 7
    %v437 = vsub.s32 %v426, %v436
    %v438 = vrot.slane %v423, %v437
    %440 = vst.msk [vmem:[#allocation16 + $0x1] sm:$0x1] %vm432, %v438
    // Predicated region
    $region78: #{tpu_custom_call.1} parent=1 // pred_check
      _
    $region79: #{tpu_custom_call.1} parent=1 // pred_check_branch
      %442 = sbr.rel (0) target = $region81
    $region80: #{tpu_custom_call.1} parent=1 // pred_region
      %s444 = ssub.s32 32, 32
      %445 = vsyncadd [#allocation4], %s444
      %s447 = sshll.u32 [#allocation16], 4
      %s448 = int_to_ptr.vmem [resolvable:$true] %s447
      %450 = dma.vmem_to_hbm [thread:$0]  %s448, 32, %s11, [#allocation4]
    $region81: #{tpu_custom_call.1} parent=1 // pred_fallthru
      _
    // Predicated region
    $region82: #{tpu_custom_call.1} parent=1 // pred_check
      _
    $region83: #{tpu_custom_call.1} parent=1 // pred_check_branch
      %452 = sbr.rel (0) target = $region85
    $region84: #{tpu_custom_call.1} parent=1 // pred_region
      %453 = dma.done [#allocation4], 32
    $region85: #{tpu_custom_call.1} parent=1 // pred_fallthru
      _
    %454 = vsyncpa [#allocation3], 1
    %455 = vsyncpa [#allocation7], 1
    %456 = vsyncpa [#allocation10], 1
    %457 = vsyncpa [#allocation13], 1
    %458 = vsyncpa [#allocation4], 1
    %459 = vsyncpa [#allocation5], 1

</llo_original>
